<compile_context>
chip_gen: v7x
topology: tpu7x:2x2x1
jax: 0.10.0
libtpu: 0.0.40
codegen_flags: <defaults>
</compile_context>

<pallas_src>
import math

import jax
import jax.numpy as jnp
from jax.experimental import pallas as pl
from jax.experimental.pallas import tpu as pltpu

LOG2PI = math.log(2.0 * math.pi)


# ----------------------------------------------------------------------------
# get_U: hardtanh(min=0, max=1) applied to the pseudo-input matrix U
# ----------------------------------------------------------------------------
def get_U(U):
    """Pseudo-inputs passed through hardtanh(0, 1).

    Kept as plain XLA: a standalone pallas_call for a tiny clip costs a fixed
    launch overhead plus an HBM round trip; XLA fuses the clip into whatever
    encoder matmul consumes U for free.
    """
    return jnp.clip(U, 0.0, 1.0)


# ----------------------------------------------------------------------------
# Kernels
# ----------------------------------------------------------------------------
def _quad_log_ps(x_ref, w1_ref, w2_ref, c_ref):
    """Shared body: per-tile (TB, K) log N(x; mu_k, var_k) - log(K)."""
    x = x_ref[...].astype(jnp.float32)                 # (TB, D)
    D = x.shape[1]
    K = w1_ref.shape[1]

    # sum_d (x - mu)^2 / var  expanded as  x^2@inv_var - 2 x@(mu*inv_var) + c
    quad = jnp.dot(x * x, w1_ref[...], preferred_element_type=jnp.float32)
    quad = quad + jnp.dot(x, w2_ref[...], preferred_element_type=jnp.float32)
    quad = quad + c_ref[...]                           # broadcast (1,K)->(TB,K)

    # log N(x; mu, var) summed over D, minus log(K) (uniform mixture weight)
    return -0.5 * (float(D) * LOG2PI + quad) - math.log(K)   # (TB, K)


def _vamp_sum_kernel(x_ref, w1_ref, w2_ref, c_ref, logmix_ref):
    """sum=True: only the per-row logsumexp leaves VMEM."""
    log_ps = _quad_log_ps(x_ref, w1_ref, w2_ref, c_ref)       # (TB, K)
    m = jnp.max(log_ps, axis=-1, keepdims=True)               # (TB, 1)
    logmix_ref[...] = m + jnp.log(
        jnp.sum(jnp.exp(log_ps - m), axis=-1, keepdims=True))


def _vamp_all_kernel(x_ref, w1_ref, w2_ref, c_ref, logps_ref):
    """sum=False: store log_ps lane-dense along B as (K, TB)."""
    log_ps = _quad_log_ps(x_ref, w1_ref, w2_ref, c_ref)       # (TB, K)
    logps_ref[...] = log_ps.T                                  # (K, TB), XLU


# ----------------------------------------------------------------------------
# Wrapper
# ----------------------------------------------------------------------------
def vamp_prior_forward(x, mus, logvars, sum=True):
    """
    :param x:        (B, D) data points
    :param mus:      (K, D) prior means
    :param logvars:  (K, D) prior log variances
    :param sum:      whether to logsumexp over the K components
    :return: (B,) if sum else (K, B)
    """
    B, D = x.shape
    K = mus.shape[0]

    # ---- grid-invariant per-component preprocessing (hoisted out of kernel)
    mus32 = mus.astype(jnp.float32)
    lv32 = logvars.astype(jnp.float32)
    inv_var = jnp.exp(-lv32)                                    # (K, D)
    w1 = inv_var.T                                              # (D, K)
    w2 = (-2.0 * mus32 * inv_var).T                             # (D, K)
    c = jnp.sum(lv32 + mus32 * mus32 * inv_var, axis=1)[None, :]  # (1, K)

    # ---- batch tile: big enough to pipeline HBM, multiple of 8 sublanes;
    # when tiling (B > TB) keep TB a multiple of 128 so the (K, B) output
    # lanes stay dense/aligned.  Working set stays tiny (<< 32 MiB) on all
    # generations including 64-MiB-VMEM v7x.
    TB = B if B <= 512 else 512
    grid = (pl.cdiv(B, TB),)

    resident = lambda i: (0, 0)
    in_specs = [
        pl.BlockSpec((TB, D), lambda i: (i, 0)),   # x: streamed over B
        pl.BlockSpec((D, K), resident),            # w1: resident
        pl.BlockSpec((D, K), resident),            # w2: resident
        pl.BlockSpec((1, K), resident),            # c : resident
    ]

    compiler_params = pltpu.CompilerParams(
        dimension_semantics=("parallel",),          # shard B tiles across TCs
        vmem_limit_bytes=32 * 1024 * 1024,
    )

    if sum:
        log_mix = pl.pallas_call(
            _vamp_sum_kernel,
            out_shape=jax.ShapeDtypeStruct((B, 1), jnp.float32),
            grid=grid,
            in_specs=in_specs,
            out_specs=pl.BlockSpec((TB, 1), lambda i: (i, 0)),
            compiler_params=compiler_params,
        )(x, w1, w2, c)
        return log_mix[:, 0]                        # (B,)

    log_ps = pl.pallas_call(
        _vamp_all_kernel,
        out_shape=jax.ShapeDtypeStruct((K, B), jnp.float32),
        grid=grid,
        in_specs=in_specs,
        out_specs=pl.BlockSpec((K, TB), lambda i: (0, i)),
        compiler_params=compiler_params,
    )(x, w1, w2, c)
    return log_ps                                   # (K, B), PyTorch convention


# ----------------------------------------------------------------------------
# pure-JAX reference (mirrors the PyTorch forward exactly)
# ----------------------------------------------------------------------------
def _ref_forward(x, mus, logvars, sum=True):
    x_ = x[None, :, :]                       # (1, B, D)
    mu_ = mus[:, None, :]                    # (K, 1, D)
    lv_ = logvars[:, None, :]                # (K, 1, D)
    log_g = -0.5 * (LOG2PI + lv_ + (x_ - mu_) ** 2 * jnp.exp(-lv_))
    log_ps = jnp.sum(log_g, axis=-1) - math.log(mus.shape[0])   # (K, B)
    if sum:
        return jax.scipy.special.logsumexp(log_ps, axis=0)
    return log_ps


if __name__ == "__main__":
    key = jax.random.PRNGKey(0)
    k_u, k_wm, k_wl, k_x, k_x2 = jax.random.split(key, 5)

    nb_components = 32     # K
    input_dim = 16         # dim of pseudo-inputs U
    latent_dim = 32        # D
    batch = 8              # B

    # --- deterministic parameter init (matches module __init__ shapes) -----
    U = 0.1 * jax.random.normal(k_u, (nb_components, input_dim), jnp.float32)

    # --- get_U: hardtanh(0, 1) ----------------------------------------------
    U_nl = get_U(U)

    # --- synthetic "encoder" (glue, plain JAX) producing mixture params -----
    W_mu = 0.5 * jax.random.normal(k_wm, (input_dim, latent_dim), jnp.float32)
    W_lv = 0.5 * jax.random.normal(k_wl, (input_dim, latent_dim), jnp.float32)
    mus = U_nl @ W_mu                                 # (K, D)
    logvars = jnp.tanh(U_nl @ W_lv)                   # (K, D), bounded log-vars

    # --- small batch ---------------------------------------------------------
    x = jax.random.normal(k_x, (batch, latent_dim), jnp.float32)

    out_sum = jax.block_until_ready(vamp_prior_forward(x, mus, logvars, sum=True))
    out_all = jax.block_until_ready(vamp_prior_forward(x, mus, logvars, sum=False))

    ref_sum = _ref_forward(x, mus, logvars, sum=True)
    ref_all = _ref_forward(x, mus, logvars, sum=False)
    assert out_sum.shape == (batch,)
    assert out_all.shape == (nb_components, batch)
    assert jnp.allclose(out_sum, ref_sum, rtol=1e-4, atol=1e-4)
    assert jnp.allclose(out_all, ref_all, rtol=1e-4, atol=1e-4)

    # --- larger ragged batch (exercises multi-tile grid + masked last tile) --
    big_batch = 1000                                  # 2 tiles of 512, ragged
    x_big = jax.random.normal(k_x2, (big_batch, latent_dim), jnp.float32)

    big_sum = jax.block_until_ready(vamp_prior_forward(x_big, mus, logvars, sum=True))
    big_all = jax.block_until_ready(vamp_prior_forward(x_big, mus, logvars, sum=False))

    ref_big_sum = _ref_forward(x_big, mus, logvars, sum=True)
    ref_big_all = _ref_forward(x_big, mus, logvars, sum=False)
    assert big_sum.shape == (big_batch,)
    assert big_all.shape == (nb_components, big_batch)
    assert jnp.allclose(big_sum, ref_big_sum, rtol=1e-4, atol=1e-4)
    assert jnp.allclose(big_all, ref_big_all, rtol=1e-4, atol=1e-4)

    print("KERNEL_OK")
</pallas_src>

<mosaic_0001>
module attributes {stable_mosaic.version = 11 : i64} {
  func.func @_vamp_sum_kernel(%arg0: i32, %arg1: memref<8x32xf32, #tpu.memory_space<vmem>>, %arg2: memref<32x32xf32, #tpu.memory_space<vmem>>, %arg3: memref<32x32xf32, #tpu.memory_space<vmem>>, %arg4: memref<1x32xf32, #tpu.memory_space<vmem>>, %arg5: memref<8x1xf32, #tpu.memory_space<vmem>>) attributes {dimension_semantics = [#tpu.dimension_semantics<parallel>], iteration_bounds = array<i64: 1>, scalar_prefetch = 0 : i64, scratch_operands = 0 : i64, tpu.core_type = #tpu.core_type<tc>, window_params = [{transform_indices = @transform_0, window_bounds = array<i64: 8, 32>}, {pipeline_mode = #tpu.pipeline_mode<synchronous>, transform_indices = @transform_1, window_bounds = array<i64: 32, 32>}, {pipeline_mode = #tpu.pipeline_mode<synchronous>, transform_indices = @transform_2, window_bounds = array<i64: 32, 32>}, {pipeline_mode = #tpu.pipeline_mode<synchronous>, transform_indices = @transform_3, window_bounds = array<i64: 1, 32>}, {transform_indices = @transform_4, window_bounds = array<i64: 8, 1>}]} {
    %c0 = arith.constant 0 : index
    %c0_0 = arith.constant 0 : index
    %0 = vector.load %arg1[%c0, %c0_0] : memref<8x32xf32, #tpu.memory_space<vmem>>, vector<8x32xf32>
    %1 = arith.mulf %0, %0 : vector<8x32xf32>
    %c0_1 = arith.constant 0 : index
    %c0_2 = arith.constant 0 : index
    %2 = vector.load %arg2[%c0_1, %c0_2] : memref<32x32xf32, #tpu.memory_space<vmem>>, vector<32x32xf32>
    %cst = arith.constant dense<0.000000e+00> : vector<8x32xf32>
    %3 = tpu.matmul %1, %2, %cst {dimension_numbers = #tpu.dot_dimension_numbers<[1], [0], [0], [1], [0, 0, 1, 1], [], []>} : vector<8x32xf32>, vector<32x32xf32>, vector<8x32xf32> -> vector<8x32xf32>
    %c0_3 = arith.constant 0 : index
    %c0_4 = arith.constant 0 : index
    %4 = vector.load %arg3[%c0_3, %c0_4] : memref<32x32xf32, #tpu.memory_space<vmem>>, vector<32x32xf32>
    %cst_5 = arith.constant dense<0.000000e+00> : vector<8x32xf32>
    %5 = tpu.matmul %0, %4, %cst_5 {dimension_numbers = #tpu.dot_dimension_numbers<[1], [0], [0], [1], [0, 0, 1, 1], [], []>} : vector<8x32xf32>, vector<32x32xf32>, vector<8x32xf32> -> vector<8x32xf32>
    %6 = arith.addf %3, %5 : vector<8x32xf32>
    %c0_6 = arith.constant 0 : index
    %c0_7 = arith.constant 0 : index
    %7 = vector.load %arg4[%c0_6, %c0_7] : memref<1x32xf32, #tpu.memory_space<vmem>>, vector<1x32xf32>
    %8 = vector.broadcast %7 : vector<1x32xf32> to vector<8x32xf32>
    %9 = arith.addf %6, %8 : vector<8x32xf32>
    %cst_8 = arith.constant 58.8120651 : f32
    %10 = vector.broadcast %cst_8 : f32 to vector<8x32xf32>
    %11 = arith.addf %10, %9 : vector<8x32xf32>
    %cst_9 = arith.constant -5.000000e-01 : f32
    %12 = vector.broadcast %cst_9 : f32 to vector<8x32xf32>
    %13 = arith.mulf %12, %11 : vector<8x32xf32>
    %cst_10 = arith.constant 3.46573591 : f32
    %14 = vector.broadcast %cst_10 : f32 to vector<8x32xf32>
    %15 = arith.subf %13, %14 : vector<8x32xf32>
    %cst_11 = arith.constant dense<0xFF800000> : vector<8xf32>
    %16 = vector.multi_reduction <maximumf>, %15, %cst_11 [1] : vector<8x32xf32> to vector<8xf32>
    %17 = vector.shape_cast %16 : vector<8xf32> to vector<8x1xf32>
    %18 = vector.broadcast %17 : vector<8x1xf32> to vector<8x32xf32>
    %19 = arith.subf %15, %18 : vector<8x32xf32>
    %20 = math.exp %19 : vector<8x32xf32>
    %cst_12 = arith.constant dense<0.000000e+00> : vector<8xf32>
    %21 = vector.multi_reduction <add>, %20, %cst_12 [1] : vector<8x32xf32> to vector<8xf32>
    %22 = vector.shape_cast %21 : vector<8xf32> to vector<8x1xf32>
    %23 = math.log %22 : vector<8x1xf32>
    %24 = arith.addf %17, %23 : vector<8x1xf32>
    %c0_13 = arith.constant 0 : index
    %c0_14 = arith.constant 0 : index
    %25 = vector.load %arg5[%c0_13, %c0_14] : memref<8x1xf32, #tpu.memory_space<vmem>>, vector<8x1xf32>
    tpu.vector_store %arg5[%c0_13, %c0_14], %24 {strides = array<i32>} : memref<8x1xf32, #tpu.memory_space<vmem>>, vector<8x1xf32>,
    return
  }
  func.func @transform_0(%arg0: i32) -> (i32, i32) {
    %c0_i32 = arith.constant 0 : i32
    %c0_i32_0 = arith.constant 0 : i32
    return %arg0, %c0_i32 : i32, i32
  }
  func.func @transform_1(%arg0: i32) -> (i32, i32) {
    %c0_i32 = arith.constant 0 : i32
    %c0_i32_0 = arith.constant 0 : i32
    %c0_i32_1 = arith.constant 0 : i32
    return %c0_i32, %c0_i32_0 : i32, i32
  }
  func.func @transform_2(%arg0: i32) -> (i32, i32) {
    %c0_i32 = arith.constant 0 : i32
    %c0_i32_0 = arith.constant 0 : i32
    %c0_i32_1 = arith.constant 0 : i32
    return %c0_i32, %c0_i32_0 : i32, i32
  }
  func.func @transform_3(%arg0: i32) -> (i32, i32) {
    %c0_i32 = arith.constant 0 : i32
    %c0_i32_0 = arith.constant 0 : i32
    %c0_i32_1 = arith.constant 0 : i32
    return %c0_i32, %c0_i32_0 : i32, i32
  }
  func.func @transform_4(%arg0: i32) -> (i32, i32) {
    %c0_i32 = arith.constant 0 : i32
    %c0_i32_0 = arith.constant 0 : i32
    return %arg0, %c0_i32 : i32, i32
  }
}

</mosaic_0001>

<llo_original>
// kernel: tpu_custom_call.1
$region0: #{tpu_custom_call.1}
  #allocation0 [shape = 'u32[]', space=smem, size = 0x4, offset = 0x4, fixed_abs, tag = 'smem constant byte address 0x4 - core index']
  #allocation1 [shape = 'u32[144,128]{1,0:T(1,128)}', space=vmem, size = 0x12000, scoped, tag = 'internal scratch']
  %s0 = inlined_call_operand.hbm [shape: f32[8,32], index: 0, kind: input, shape index: {}]
  %s1 = inlined_call_operand.hbm [shape: f32[32,32], index: 1, kind: input, shape index: {}]
  %s2 = inlined_call_operand.hbm [shape: f32[32,32], index: 2, kind: input, shape index: {}]
  %s3 = inlined_call_operand.vmem [shape: f32[1,32], index: 3, kind: input, shape index: {}]
  %s4 = inlined_call_operand.vmem [shape: f32[8,1], index: 4, kind: output, shape index: {}]
  %s5 = sld [smem:[#allocation0]]
  $region38: #{tpu_custom_call.1} parent=0
    _
  %s7 = ssub.s32 1, %s5
  %s8 = scalar_select 0, %s7, %s5
  $region1: #{tpu_custom_call.1} parent=0
    #allocation2 [shape = 'u8[4096]{0}', space=vmem, size = 0x1000, scoped, tag = 'input window, operand 0, single buffered']
    #allocation3 [shape = 's32[1]{0}', space=sflag, size = 0x4, scoped, tag = 'scoped memory for tpu_custom_call.1']
    #allocation4 [shape = 'u8[16384]{0}', space=vmem, size = 0x4000, scoped, tag = 'input window, operand 1, single buffered']
    #allocation5 [shape = 's32[1]{0}', space=sflag, size = 0x4, scoped, tag = 'scoped memory for tpu_custom_call.1']
    #allocation6 [shape = 'u8[16384]{0}', space=vmem, size = 0x4000, scoped, tag = 'input window, operand 2, single buffered']
    %9 = vsyncpa [#allocation3], 0
    %10 = vsyncpa [#allocation5], 0
    // Predicated region
    $region2: #{tpu_custom_call.1} parent=1 // pred_check
      _
    $region3: #{tpu_custom_call.1} parent=1 // pred_check_branch
      %12 = sbr.rel (0) target = $region5
    $region4: #{tpu_custom_call.1} parent=1 // pred_region
      %s14 = ssub.s32 128, 128
      %15 = vsyncadd [#allocation3], %s14
      %s17 = sshll.u32 [#allocation2], 4
      %s18 = int_to_ptr.vmem [resolvable:$true] %s17
      %20 = dma.hbm_to_vmem [thread:$0]  %s0, 128, %s18, [#allocation3]
    $region5: #{tpu_custom_call.1} parent=1 // pred_fallthru
      _
    // Predicated region
    $region6: #{tpu_custom_call.1} parent=1 // pred_check
      _
    $region7: #{tpu_custom_call.1} parent=1 // pred_check_branch
      %22 = sbr.rel (0) target = $region9
    $region8: #{tpu_custom_call.1} parent=1 // pred_region
      %s24 = ssub.s32 512, 512
      %25 = vsyncadd [#allocation5], %s24
      %s26 = sshll.u32 [#allocation4], 4
      %s27 = int_to_ptr.vmem [resolvable:$true] %s26
      %32 = dma.hbm_to_vmem [thread:$0]  %s1, 512, %s27, [#allocation5], 128, 128, 8
    $region9: #{tpu_custom_call.1} parent=1 // pred_fallthru
      _
    // Predicated region
    $region10: #{tpu_custom_call.1} parent=1 // pred_check
      _
    $region11: #{tpu_custom_call.1} parent=1 // pred_check_branch
      %34 = sbr.rel (0) target = $region13
    $region12: #{tpu_custom_call.1} parent=1 // pred_region
      %s36 = ssub.s32 512, 512
      %37 = vsyncadd [#allocation5], %s36
      %s38 = sshll.u32 [#allocation6], 4
      %s39 = int_to_ptr.vmem [resolvable:$true] %s38
      %44 = dma.hbm_to_vmem [thread:$0]  %s2, 512, %s39, [#allocation5], 128, 128, 8
    $region13: #{tpu_custom_call.1} parent=1 // pred_fallthru
      _
    // Predicated region
    $region14: #{tpu_custom_call.1} parent=1 // pred_check
      _
    $region15: #{tpu_custom_call.1} parent=1 // pred_check_branch
      %46 = sbr.rel (0) target = $region17
    $region16: #{tpu_custom_call.1} parent=1 // pred_region
      _
    $region17: #{tpu_custom_call.1} parent=1 // pred_fallthru
      _
    // Predicated region
    $region18: #{tpu_custom_call.1} parent=1 // pred_check
      _
    $region19: #{tpu_custom_call.1} parent=1 // pred_check_branch
      %48 = sbr.rel (0) target = $region21
    $region20: #{tpu_custom_call.1} parent=1 // pred_region
      %49 = dma.done [#allocation3], 128
    $region21: #{tpu_custom_call.1} parent=1 // pred_fallthru
      _
    // Predicated region
    $region22: #{tpu_custom_call.1} parent=1 // pred_check
      _
    $region23: #{tpu_custom_call.1} parent=1 // pred_check_branch
      %51 = sbr.rel (0) target = $region25
    $region24: #{tpu_custom_call.1} parent=1 // pred_region
      %52 = dma.done [#allocation5], 512
    $region25: #{tpu_custom_call.1} parent=1 // pred_fallthru
      _
    // Predicated region
    $region26: #{tpu_custom_call.1} parent=1 // pred_check
      _
    $region27: #{tpu_custom_call.1} parent=1 // pred_check_branch
      %54 = sbr.rel (0) target = $region29
    $region28: #{tpu_custom_call.1} parent=1 // pred_region
      %55 = dma.done [#allocation5], 512
    $region29: #{tpu_custom_call.1} parent=1 // pred_fallthru
      _
    %v56 = vld [vmem:[#allocation2] sm:$0xff]
    %v57 = vmul.f32 %v56, %v56
    %v58 = vld [vmem:[#allocation4] sm:$0xff]
    %v59 = vld [vmem:[#allocation4 + $0x8] sm:$0xff]
    %v60 = vld [vmem:[#allocation4 + $0x10] sm:$0xff]
    %v61 = vld [vmem:[#allocation4 + $0x18] sm:$0xff]
    %v62 = vld [vmem:[#allocation6] sm:$0xff]
    %v63 = vld [vmem:[#allocation6 + $0x8] sm:$0xff]
    %v64 = vld [vmem:[#allocation6 + $0x10] sm:$0xff]
    %v65 = vld [vmem:[#allocation6 + $0x18] sm:$0xff]
    %vm66 = vcmask 261120
    %v68 = vsel %vm66, %v56, 0
    %70 = vmatprep.subr.mxu0 0.0
    %71 = vmatpush1.msra.mxu0 %v62
    %72 = vmatprep.subr.mxu0 0.0
    %73 = vmatpush1.msra.mxu0 %v63
    %74 = vmatprep.subr.mxu0 0.0
    %75 = vmatpush1.msra.mxu0 %v64
    %76 = vmatprep.subr.mxu0 0.0
    %77 = vmatpush1.msra.mxu0 %v65
    %78 = vmatprep.subr.mxu0 0.0
    %79 = vmatpush1.msra.mxu0 0.0
    %80 = vmatprep.subr.mxu0 0.0
    %81 = vmatpush1.msra.mxu0 0.0
    %82 = vmatprep.subr.mxu0 0.0
    %83 = vmatpush1.msra.mxu0 0.0
    %84 = vmatprep.subr.mxu0 0.0
    %85 = vmatpush1.msra.mxu0 0.0
    %86 = vmatprep.subr.mxu0 0.0
    %87 = vmatpush1.msra.mxu0 0.0
    %88 = vmatprep.subr.mxu0 0.0
    %89 = vmatpush1.msra.mxu0 0.0
    %90 = vmatprep.subr.mxu0 0.0
    %91 = vmatpush1.msra.mxu0 0.0
    %92 = vmatprep.subr.mxu0 0.0
    %93 = vmatpush1.msra.mxu0 0.0
    %94 = vmatprep.subr.mxu0 0.0
    %95 = vmatpush1.msra.mxu0 0.0
    %96 = vmatprep.subr.mxu0 0.0
    %97 = vmatpush1.msra.mxu0 0.0
    %98 = vmatprep.subr.mxu0 0.0
    %99 = vmatpush1.msra.mxu0 0.0
    %100 = vmatprep.subr.mxu0 0.0
    %101 = vmatpush1.msra.mxu0 0.0
    %102 = vmatprep.subr.mxu0 0.0
    %103 = vmatpush1.msra.mxu0 0.0
    %104 = vmatprep.subr.mxu0 0.0
    %105 = vmatpush1.msra.mxu0 0.0
    %106 = vmatprep.subr.mxu0 0.0
    %107 = vmatpush1.msra.mxu0 0.0
    %108 = vmatprep.subr.mxu0 0.0
    %109 = vmatpush1.msra.mxu0 0.0
    %110 = vmatprep.subr.mxu0 0.0
    %111 = vmatpush1.msra.mxu0 0.0
    %112 = vmatprep.subr.mxu0 0.0
    %113 = vmatpush1.msra.mxu0 0.0
    %114 = vmatprep.subr.mxu0 0.0
    %115 = vmatpush1.msra.mxu0 0.0
    %116 = vmatprep.subr.mxu0 0.0
    %117 = vmatpush1.msra.mxu0 0.0
    %118 = vmatprep.subr.mxu0 0.0
    %119 = vmatpush1.msra.mxu0 0.0
    %120 = vmatprep.subr.mxu0 0.0
    %121 = vmatpush1.msra.mxu0 0.0
    %122 = vmatprep.subr.mxu0 0.0
    %123 = vmatpush1.msra.mxu0 0.0
    %124 = vmatprep.subr.mxu0 0.0
    %125 = vmatpush1.msra.mxu0 0.0
    %126 = vmatprep.subr.mxu0 0.0
    %127 = vmatpush1.msra.mxu0 0.0
    %128 = vmatprep.subr.mxu0 0.0
    %129 = vmatpush1.msra.mxu0 0.0
    %130 = vmatprep.subr.mxu0 0.0
    %131 = vmatpush1.msra.mxu0 0.0
    %132 = vmatprep.subr.mxu0 0.0
    %133 = vmatpush1.msra.mxu0 0.0
    %134 = vmatprep.mubr.f32.mxu0 0.0
    %135 = vmatmul.mubr.f32.gmra.mrb[0].mxu0 %v68
    %v136 = vpop.f32.mrb[0].mxu0
    %v137 = vadd.f32 0.0, %v136
    %v138 = vpop.f32.mrb[0].mxu0
    %139 = vdwg.mxu0
    %v141 = vsel %vm66, %v57, 0
    %143 = vmatprep.subr.mxu0 0.0
    %144 = vmatpush1.msra.mxu0 %v58
    %145 = vmatprep.subr.mxu0 0.0
    %146 = vmatpush1.msra.mxu0 %v59
    %147 = vmatprep.subr.mxu0 0.0
    %148 = vmatpush1.msra.mxu0 %v60
    %149 = vmatprep.subr.mxu0 0.0
    %150 = vmatpush1.msra.mxu0 %v61
    %151 = vmatprep.subr.mxu0 0.0
    %152 = vmatpush1.msra.mxu0 0.0
    %153 = vmatprep.subr.mxu0 0.0
    %154 = vmatpush1.msra.mxu0 0.0
    %155 = vmatprep.subr.mxu0 0.0
    %156 = vmatpush1.msra.mxu0 0.0
    %157 = vmatprep.subr.mxu0 0.0
    %158 = vmatpush1.msra.mxu0 0.0
    %159 = vmatprep.subr.mxu0 0.0
    %160 = vmatpush1.msra.mxu0 0.0
    %161 = vmatprep.subr.mxu0 0.0
    %162 = vmatpush1.msra.mxu0 0.0
    %163 = vmatprep.subr.mxu0 0.0
    %164 = vmatpush1.msra.mxu0 0.0
    %165 = vmatprep.subr.mxu0 0.0
    %166 = vmatpush1.msra.mxu0 0.0
    %167 = vmatprep.subr.mxu0 0.0
    %168 = vmatpush1.msra.mxu0 0.0
    %169 = vmatprep.subr.mxu0 0.0
    %170 = vmatpush1.msra.mxu0 0.0
    %171 = vmatprep.subr.mxu0 0.0
    %172 = vmatpush1.msra.mxu0 0.0
    %173 = vmatprep.subr.mxu0 0.0
    %174 = vmatpush1.msra.mxu0 0.0
    %175 = vmatprep.subr.mxu0 0.0
    %176 = vmatpush1.msra.mxu0 0.0
    %177 = vmatprep.subr.mxu0 0.0
    %178 = vmatpush1.msra.mxu0 0.0
    %179 = vmatprep.subr.mxu0 0.0
    %180 = vmatpush1.msra.mxu0 0.0
    %181 = vmatprep.subr.mxu0 0.0
    %182 = vmatpush1.msra.mxu0 0.0
    %183 = vmatprep.subr.mxu0 0.0
    %184 = vmatpush1.msra.mxu0 0.0
    %185 = vmatprep.subr.mxu0 0.0
    %186 = vmatpush1.msra.mxu0 0.0
    %187 = vmatprep.subr.mxu0 0.0
    %188 = vmatpush1.msra.mxu0 0.0
    %189 = vmatprep.subr.mxu0 0.0
    %190 = vmatpush1.msra.mxu0 0.0
    %191 = vmatprep.subr.mxu0 0.0
    %192 = vmatpush1.msra.mxu0 0.0
    %193 = vmatprep.subr.mxu0 0.0
    %194 = vmatpush1.msra.mxu0 0.0
    %195 = vmatprep.subr.mxu0 0.0
    %196 = vmatpush1.msra.mxu0 0.0
    %197 = vmatprep.subr.mxu0 0.0
    %198 = vmatpush1.msra.mxu0 0.0
    %199 = vmatprep.subr.mxu0 0.0
    %200 = vmatpush1.msra.mxu0 0.0
    %201 = vmatprep.subr.mxu0 0.0
    %202 = vmatpush1.msra.mxu0 0.0
    %203 = vmatprep.subr.mxu0 0.0
    %204 = vmatpush1.msra.mxu0 0.0
    %205 = vmatprep.subr.mxu0 0.0
    %206 = vmatpush1.msra.mxu0 0.0
    %207 = vmatprep.mubr.f32.mxu0 0.0
    %208 = vmatmul.mubr.f32.gmra.mrb[0].mxu0 %v141
    %v209 = vpop.f32.mrb[0].mxu0
    %v210 = vadd.f32 %v137, %v209
    %v211 = vpop.f32.mrb[0].mxu0
    %212 = vdwg.mxu0
    %v213 = vld [vmem:[%s3] sm:$0x1]
    %v215 = vlaneseq
    %v216 = vshrl.u32 %v215, 7
    %v217 = vsub.s32 0, %v216
    %v218 = vrot.slane %v213, %v217
    %v220 = vadd.f32 %v210, %v218
    %v221 = vadd.f32 %v220, 58.812065
    %v222 = vmul.f32 %v221, -0.5
    %v223 = vsub.f32 %v222, 3.465736
    %v224 = vsel %vm66, %v223, -inf
    %225 = vmax.xlane.f32.xlu0 %v224
    %v226 = vpop.xlane.xlu0 %225
    %v227 = vsub.f32 %v223, %v226
    %v228 = vmul.f32 %v227, 1.442695
    %v229 = vpow.pop %v228
    %v230 = vsel %vm66, %v229, 0.0
    %231 = vadd.xlane.f32.xlu0 %v230
    %v232 = vpop.xlane.xlu0 %231
    %v233 = vlog2.pop %v232
    %v234 = vmul.f32 %v233, 0.6931472
    %v235 = vadd.f32 %v226, %v234
    %vm236 = vcmask 7168
    %237 = vst.msk [vmem:[%s4] sm:$0xff] %vm236, %v235
    // Predicated region
    $region30: #{tpu_custom_call.1} parent=1 // pred_check
      _
    $region31: #{tpu_custom_call.1} parent=1 // pred_check_branch
      %239 = sbr.rel (0) target = $region33
    $region32: #{tpu_custom_call.1} parent=1 // pred_region
      _
    $region33: #{tpu_custom_call.1} parent=1 // pred_fallthru
      _
    // Predicated region
    $region34: #{tpu_custom_call.1} parent=1 // pred_check
      _
    $region35: #{tpu_custom_call.1} parent=1 // pred_check_branch
      %241 = sbr.rel (0) target = $region37
    $region36: #{tpu_custom_call.1} parent=1 // pred_region
      _
    $region37: #{tpu_custom_call.1} parent=1 // pred_fallthru
      _
    %242 = vsyncpa [#allocation3], 1
    %243 = vsyncpa [#allocation5], 1

</llo_original>
